<compile_context>
chip_gen: v7x
topology: tpu7x:2x2x1
jax: 0.10.0
libtpu: 0.0.40
codegen_flags: <defaults>
</compile_context>

<pallas_src>
import functools

import jax
import jax.numpy as jnp
from jax.experimental import pallas as pl
from jax.experimental.pallas import tpu as pltpu

LANE = 128
SUBLANE = 8
TB_MAX = 2048  # batch tile rows; ~14 MiB VMEM with double-buffering at f32 x


def _round_up(n, m):
    return (n + m - 1) // m * m


def mlp_kernel(x_ref, w1_ref, b1_ref, w2_ref, b2_ref, w3_ref, b3_ref, o_ref):
    # x arrives as f32 straight from HBM; cast to bf16 for the MXU in-kernel.
    x = x_ref[...].astype(jnp.bfloat16)
    h1 = jnp.dot(x, w1_ref[...], preferred_element_type=jnp.float32) + b1_ref[...]
    h1 = jnp.maximum(h1, 0.0).astype(jnp.bfloat16)
    h2 = jnp.dot(h1, w2_ref[...], preferred_element_type=jnp.float32) + b2_ref[...]
    h2 = jnp.maximum(h2, 0.0).astype(jnp.bfloat16)
    o_ref[...] = (jnp.dot(h2, w3_ref[...], preferred_element_type=jnp.float32)
                  + b3_ref[...]).astype(o_ref.dtype)


def prepare_params(params):
    """One-time prep: transpose to [in, out], zero-pad out-dims to 128 lanes, cast to bf16.

    Padded columns/biases are zero, so ReLU keeps padded lanes exactly zero and the
    padded output lanes are exactly zero (sliced off in the wrapper).  The contraction
    dim of w1 stays at 784 (matches the un-padded x stream).
    """
    w1, b1, w2, b2, w3, b3 = params
    n_units, n_in = w1.shape
    n_out = w3.shape[0]
    H = _round_up(n_units, LANE)   # 32 -> 128 (one MXU tile wide)
    O = _round_up(n_out, LANE)     # 10 -> 128 (lane-dense, unmasked output stores)

    def pad2(a, r, c):
        return jnp.pad(a, ((0, r - a.shape[0]), (0, c - a.shape[1])))

    w1t = pad2(w1.T.astype(jnp.float32), n_in, H).astype(jnp.bfloat16)   # (784, 128)
    w2t = pad2(w2.T.astype(jnp.float32), H, H).astype(jnp.bfloat16)      # (128, 128)
    w3t = pad2(w3.T.astype(jnp.float32), H, O).astype(jnp.bfloat16)      # (128, 128)
    b1p = jnp.pad(b1.astype(jnp.float32), (0, H - b1.shape[0])).reshape(1, H)
    b2p = jnp.pad(b2.astype(jnp.float32), (0, H - b2.shape[0])).reshape(1, H)
    b3p = jnp.pad(b3.astype(jnp.float32), (0, O - b3.shape[0])).reshape(1, O)
    meta = dict(n_in=n_in, n_out=n_out, H=H, O=O)
    return (w1t, b1p, w2t, b2p, w3t, b3p), meta


def mlp_forward(x, prepared, meta):
    """x: any shape that flattens to [-1, 784] (e.g. NCHW [B, 1, 28, 28]). Returns f32 [B, 10]."""
    w1t, b1p, w2t, b2p, w3t, b3p = prepared
    n_in, n_out = meta["n_in"], meta["n_out"]
    H, O = meta["H"], meta["O"]

    x2d = x.reshape(-1, n_in)
    B = x2d.shape[0]

    # Tile size: >= 2 grid steps whenever B >= 16 (so both v7x TCs get work),
    # 8-aligned rows, capped at TB_MAX.  Small batches use one full-dim block.
    if B >= 2 * SUBLANE:
        TB = min(TB_MAX, _round_up(pl.cdiv(B, 2), SUBLANE))
    else:
        TB = B
    grid = (pl.cdiv(B, TB),)

    flops = 2 * B * (n_in * H + H * H + H * O)
    bytes_accessed = (B * n_in * x2d.dtype.itemsize            # x streamed as-is
                      + (n_in * H + H * H + H * O) * 2         # bf16 weights
                      + (2 * H + O) * 4                        # f32 biases
                      + B * O * 2)                             # bf16 output

    out = pl.pallas_call(
        mlp_kernel,
        out_shape=jax.ShapeDtypeStruct((B, O), jnp.bfloat16),
        grid=grid,
        in_specs=[
            pl.BlockSpec((TB, n_in), lambda i: (i, 0)),   # x: tiled over batch (pipelined)
            pl.BlockSpec((n_in, H), lambda i: (0, 0)),    # weights / biases stay resident
            pl.BlockSpec((1, H), lambda i: (0, 0)),
            pl.BlockSpec((H, H), lambda i: (0, 0)),
            pl.BlockSpec((1, H), lambda i: (0, 0)),
            pl.BlockSpec((H, O), lambda i: (0, 0)),
            pl.BlockSpec((1, O), lambda i: (0, 0)),
        ],
        out_specs=pl.BlockSpec((TB, O), lambda i: (i, 0)),
        compiler_params=pltpu.CompilerParams(
            dimension_semantics=("parallel",),        # batch tiles shard across v7x's 2 TCs
            vmem_limit_bytes=32 * 1024 * 1024,        # ~14 MiB used at TB=2048 (double-buffered)
        ),
        cost_estimate=pl.CostEstimate(
            flops=flops, transcendentals=0, bytes_accessed=bytes_accessed),
    )(x2d, w1t, b1p, w2t, b2p, w3t, b3p)

    # Padded lanes are exactly zero; tail rows (>= B) never exist in `out`.
    return out[:, :n_out].astype(jnp.float32)


def init_params(key, n_units):
    # Deterministic init mimicking nn.Linear default (uniform +/- 1/sqrt(fan_in)).
    k1, k2, k3, k4, k5, k6 = jax.random.split(key, 6)

    def lin(kw, kb, fan_in, fan_out):
        bound = 1.0 / jnp.sqrt(fan_in)
        w = jax.random.uniform(kw, (fan_out, fan_in), jnp.float32, -bound, bound)
        b = jax.random.uniform(kb, (fan_out,), jnp.float32, -bound, bound)
        return w, b

    w1, b1 = lin(k1, k2, 28 * 28, n_units)
    w2, b2 = lin(k3, k4, n_units, n_units)
    w3, b3 = lin(k5, k6, n_units, 10)
    return (w1, b1, w2, b2, w3, b3)


if __name__ == "__main__":
    key = jax.random.PRNGKey(0)
    kx, kp = jax.random.split(key)

    n_units = 32
    params = init_params(kp, n_units)

    # One-time parameter preparation (hoisted out of the per-call forward path).
    prepared, meta = prepare_params(params)
    fwd = jax.jit(functools.partial(mlp_forward, meta=meta))

    w1, b1, w2, b2, w3, b3 = params

    def reference(xr):
        # Pure-JAX reference with the same bf16-operand / f32-accumulate path,
        # including the bf16 rounding of the stored logits.
        def bdot(a, b):
            return jnp.dot(a.astype(jnp.bfloat16), b.astype(jnp.bfloat16),
                           preferred_element_type=jnp.float32)
        r = jnp.maximum(bdot(xr, w1.T) + b1, 0.0)
        r = jnp.maximum(bdot(r, w2.T) + b2, 0.0)
        r = bdot(r, w3.T) + b3
        return r.astype(jnp.bfloat16).astype(jnp.float32)

    # batch=8 exercises the single-tile path; batch=50 exercises the multi-tile
    # grid with a masked ragged tail.
    for batch in (8, 50):
        x = jax.random.normal(kx, (batch, 1, 28, 28), jnp.float32)  # NCHW MNIST-like input
        out = fwd(x, prepared)
        jax.block_until_ready(out)

        ref = reference(x.reshape(-1, 28 * 28))
        assert out.shape == (batch, 10)
        err = float(jnp.max(jnp.abs(out - ref)))
        assert jnp.allclose(out, ref, atol=2e-2, rtol=2e-2), err

    print("KERNEL_OK")
</pallas_src>

<mosaic_0001>
module attributes {stable_mosaic.version = 11 : i64} {
  func.func @mlp_kernel(%arg0: i32, %arg1: memref<8x784xf32, #tpu.memory_space<vmem>>, %arg2: memref<784x128xbf16, #tpu.memory_space<vmem>>, %arg3: memref<1x128xf32, #tpu.memory_space<vmem>>, %arg4: memref<128x128xbf16, #tpu.memory_space<vmem>>, %arg5: memref<1x128xf32, #tpu.memory_space<vmem>>, %arg6: memref<128x128xbf16, #tpu.memory_space<vmem>>, %arg7: memref<1x128xf32, #tpu.memory_space<vmem>>, %arg8: memref<8x128xbf16, #tpu.memory_space<vmem>>) attributes {dimension_semantics = [#tpu.dimension_semantics<parallel>], iteration_bounds = array<i64: 1>, scalar_prefetch = 0 : i64, scratch_operands = 0 : i64, tpu.core_type = #tpu.core_type<tc>, window_params = [{transform_indices = @transform_0, window_bounds = array<i64: 8, 784>}, {pipeline_mode = #tpu.pipeline_mode<synchronous>, transform_indices = @transform_1, window_bounds = array<i64: 784, 128>}, {pipeline_mode = #tpu.pipeline_mode<synchronous>, transform_indices = @transform_2, window_bounds = array<i64: 1, 128>}, {pipeline_mode = #tpu.pipeline_mode<synchronous>, transform_indices = @transform_3, window_bounds = array<i64: 128, 128>}, {pipeline_mode = #tpu.pipeline_mode<synchronous>, transform_indices = @transform_4, window_bounds = array<i64: 1, 128>}, {pipeline_mode = #tpu.pipeline_mode<synchronous>, transform_indices = @transform_5, window_bounds = array<i64: 128, 128>}, {pipeline_mode = #tpu.pipeline_mode<synchronous>, transform_indices = @transform_6, window_bounds = array<i64: 1, 128>}, {transform_indices = @transform_7, window_bounds = array<i64: 8, 128>}]} {
    %c0 = arith.constant 0 : index
    %c0_0 = arith.constant 0 : index
    %0 = vector.load %arg1[%c0, %c0_0] : memref<8x784xf32, #tpu.memory_space<vmem>>, vector<8x784xf32>
    %1 = arith.truncf %0 : vector<8x784xf32> to vector<8x784xbf16>
    %c0_1 = arith.constant 0 : index
    %c0_2 = arith.constant 0 : index
    %2 = vector.load %arg2[%c0_1, %c0_2] : memref<784x128xbf16, #tpu.memory_space<vmem>>, vector<784x128xbf16>
    %cst = arith.constant dense<0.000000e+00> : vector<8x128xf32>
    %3 = tpu.matmul %1, %2, %cst {dimension_numbers = #tpu.dot_dimension_numbers<[1], [0], [0], [1], [0, 0, 1, 1], [], []>} : vector<8x784xbf16>, vector<784x128xbf16>, vector<8x128xf32> -> vector<8x128xf32>
    %c0_3 = arith.constant 0 : index
    %c0_4 = arith.constant 0 : index
    %4 = vector.load %arg3[%c0_3, %c0_4] : memref<1x128xf32, #tpu.memory_space<vmem>>, vector<1x128xf32>
    %5 = vector.broadcast %4 : vector<1x128xf32> to vector<8x128xf32>
    %6 = arith.addf %3, %5 : vector<8x128xf32>
    %cst_5 = arith.constant 0.000000e+00 : f32
    %7 = vector.broadcast %cst_5 : f32 to vector<8x128xf32>
    %8 = arith.maximumf %6, %7 : vector<8x128xf32>
    %9 = arith.truncf %8 : vector<8x128xf32> to vector<8x128xbf16>
    %c0_6 = arith.constant 0 : index
    %c0_7 = arith.constant 0 : index
    %10 = vector.load %arg4[%c0_6, %c0_7] : memref<128x128xbf16, #tpu.memory_space<vmem>>, vector<128x128xbf16>
    %cst_8 = arith.constant dense<0.000000e+00> : vector<8x128xf32>
    %11 = tpu.matmul %9, %10, %cst_8 {dimension_numbers = #tpu.dot_dimension_numbers<[1], [0], [0], [1], [0, 0, 1, 1], [], []>} : vector<8x128xbf16>, vector<128x128xbf16>, vector<8x128xf32> -> vector<8x128xf32>
    %c0_9 = arith.constant 0 : index
    %c0_10 = arith.constant 0 : index
    %12 = vector.load %arg5[%c0_9, %c0_10] : memref<1x128xf32, #tpu.memory_space<vmem>>, vector<1x128xf32>
    %13 = vector.broadcast %12 : vector<1x128xf32> to vector<8x128xf32>
    %14 = arith.addf %11, %13 : vector<8x128xf32>
    %cst_11 = arith.constant 0.000000e+00 : f32
    %15 = vector.broadcast %cst_11 : f32 to vector<8x128xf32>
    %16 = arith.maximumf %14, %15 : vector<8x128xf32>
    %17 = arith.truncf %16 : vector<8x128xf32> to vector<8x128xbf16>
    %c0_12 = arith.constant 0 : index
    %c0_13 = arith.constant 0 : index
    %18 = vector.load %arg6[%c0_12, %c0_13] : memref<128x128xbf16, #tpu.memory_space<vmem>>, vector<128x128xbf16>
    %cst_14 = arith.constant dense<0.000000e+00> : vector<8x128xf32>
    %19 = tpu.matmul %17, %18, %cst_14 {dimension_numbers = #tpu.dot_dimension_numbers<[1], [0], [0], [1], [0, 0, 1, 1], [], []>} : vector<8x128xbf16>, vector<128x128xbf16>, vector<8x128xf32> -> vector<8x128xf32>
    %c0_15 = arith.constant 0 : index
    %c0_16 = arith.constant 0 : index
    %20 = vector.load %arg7[%c0_15, %c0_16] : memref<1x128xf32, #tpu.memory_space<vmem>>, vector<1x128xf32>
    %21 = vector.broadcast %20 : vector<1x128xf32> to vector<8x128xf32>
    %22 = arith.addf %19, %21 : vector<8x128xf32>
    %23 = arith.truncf %22 : vector<8x128xf32> to vector<8x128xbf16>
    %c0_17 = arith.constant 0 : index
    %c0_18 = arith.constant 0 : index
    %24 = vector.load %arg8[%c0_17, %c0_18] : memref<8x128xbf16, #tpu.memory_space<vmem>>, vector<8x128xbf16>
    tpu.vector_store %arg8[%c0_17, %c0_18], %23 {strides = array<i32>} : memref<8x128xbf16, #tpu.memory_space<vmem>>, vector<8x128xbf16>,
    return
  }
  func.func @transform_0(%arg0: i32) -> (i32, i32) {
    %c0_i32 = arith.constant 0 : i32
    %c0_i32_0 = arith.constant 0 : i32
    return %arg0, %c0_i32 : i32, i32
  }
  func.func @transform_1(%arg0: i32) -> (i32, i32) {
    %c0_i32 = arith.constant 0 : i32
    %c0_i32_0 = arith.constant 0 : i32
    %c0_i32_1 = arith.constant 0 : i32
    return %c0_i32, %c0_i32_0 : i32, i32
  }
  func.func @transform_2(%arg0: i32) -> (i32, i32) {
    %c0_i32 = arith.constant 0 : i32
    %c0_i32_0 = arith.constant 0 : i32
    %c0_i32_1 = arith.constant 0 : i32
    return %c0_i32, %c0_i32_0 : i32, i32
  }
  func.func @transform_3(%arg0: i32) -> (i32, i32) {
    %c0_i32 = arith.constant 0 : i32
    %c0_i32_0 = arith.constant 0 : i32
    %c0_i32_1 = arith.constant 0 : i32
    return %c0_i32, %c0_i32_0 : i32, i32
  }
  func.func @transform_4(%arg0: i32) -> (i32, i32) {
    %c0_i32 = arith.constant 0 : i32
    %c0_i32_0 = arith.constant 0 : i32
    %c0_i32_1 = arith.constant 0 : i32
    return %c0_i32, %c0_i32_0 : i32, i32
  }
  func.func @transform_5(%arg0: i32) -> (i32, i32) {
    %c0_i32 = arith.constant 0 : i32
    %c0_i32_0 = arith.constant 0 : i32
    %c0_i32_1 = arith.constant 0 : i32
    return %c0_i32, %c0_i32_0 : i32, i32
  }
  func.func @transform_6(%arg0: i32) -> (i32, i32) {
    %c0_i32 = arith.constant 0 : i32
    %c0_i32_0 = arith.constant 0 : i32
    %c0_i32_1 = arith.constant 0 : i32
    return %c0_i32, %c0_i32_0 : i32, i32
  }
  func.func @transform_7(%arg0: i32) -> (i32, i32) {
    %c0_i32 = arith.constant 0 : i32
    %c0_i32_0 = arith.constant 0 : i32
    return %arg0, %c0_i32 : i32, i32
  }
}

</mosaic_0001>

<llo_original>
// kernel: mlp_forward.1
$region0: #{mlp_forward.1}
  #allocation0 [shape = 'u32[]', space=smem, size = 0x4, offset = 0x4, fixed_abs, tag = 'smem constant byte address 0x4 - core index']
  #allocation1 [shape = 'u32[144,128]{1,0:T(1,128)}', space=vmem, size = 0x12000, scoped, tag = 'internal scratch']
  %s0 = inlined_call_operand.vmem [shape: f32[8,784], index: 0, kind: input, shape index: {}]
  %s1 = inlined_call_operand.vmem [shape: bf16[784,128], index: 1, kind: input, shape index: {}]
  %s2 = inlined_call_operand.vmem [shape: f32[1,128], index: 2, kind: input, shape index: {}]
  %s3 = inlined_call_operand.vmem [shape: bf16[128,128], index: 3, kind: input, shape index: {}]
  %s4 = inlined_call_operand.vmem [shape: f32[1,128], index: 4, kind: input, shape index: {}]
  %s5 = inlined_call_operand.vmem [shape: bf16[128,128], index: 5, kind: input, shape index: {}]
  %s6 = inlined_call_operand.vmem [shape: f32[1,128], index: 6, kind: input, shape index: {}]
  %s7 = inlined_call_operand.vmem [shape: bf16[8,128], index: 7, kind: output, shape index: {}]
  %s8 = sld [smem:[#allocation0]]
  $region38: #{mlp_forward.1} parent=0
    _
  %s10 = ssub.s32 1, %s8
  %s11 = scalar_select 0, %s10, %s8
  // Predicated region
  $region2: #{mlp_forward.1} parent=0 // pred_check
    _
  $region3: #{mlp_forward.1} parent=0 // pred_check_branch
    %13 = sbr.rel (0) target = $region5
  $region4: #{mlp_forward.1} parent=0 // pred_region
    _
  $region5: #{mlp_forward.1} parent=0 // pred_fallthru
    _
  // Predicated region
  $region6: #{mlp_forward.1} parent=0 // pred_check
    _
  $region7: #{mlp_forward.1} parent=0 // pred_check_branch
    %15 = sbr.rel (0) target = $region9
  $region8: #{mlp_forward.1} parent=0 // pred_region
    _
  $region9: #{mlp_forward.1} parent=0 // pred_fallthru
    _
  // Predicated region
  $region10: #{mlp_forward.1} parent=0 // pred_check
    _
  $region11: #{mlp_forward.1} parent=0 // pred_check_branch
    %17 = sbr.rel (0) target = $region13
  $region12: #{mlp_forward.1} parent=0 // pred_region
    _
  $region13: #{mlp_forward.1} parent=0 // pred_fallthru
    _
  // Predicated region
  $region14: #{mlp_forward.1} parent=0 // pred_check
    _
  $region15: #{mlp_forward.1} parent=0 // pred_check_branch
    %19 = sbr.rel (0) target = $region17
  $region16: #{mlp_forward.1} parent=0 // pred_region
    _
  $region17: #{mlp_forward.1} parent=0 // pred_fallthru
    _
  // Predicated region
  $region18: #{mlp_forward.1} parent=0 // pred_check
    _
  $region19: #{mlp_forward.1} parent=0 // pred_check_branch
    %21 = sbr.rel (0) target = $region21
  $region20: #{mlp_forward.1} parent=0 // pred_region
    _
  $region21: #{mlp_forward.1} parent=0 // pred_fallthru
    _
  // Predicated region
  $region22: #{mlp_forward.1} parent=0 // pred_check
    _
  $region23: #{mlp_forward.1} parent=0 // pred_check_branch
    %23 = sbr.rel (0) target = $region25
  $region24: #{mlp_forward.1} parent=0 // pred_region
    _
  $region25: #{mlp_forward.1} parent=0 // pred_fallthru
    _
  // Predicated region
  $region26: #{mlp_forward.1} parent=0 // pred_check
    _
  $region27: #{mlp_forward.1} parent=0 // pred_check_branch
    %25 = sbr.rel (0) target = $region29
  $region28: #{mlp_forward.1} parent=0 // pred_region
    _
  $region29: #{mlp_forward.1} parent=0 // pred_fallthru
    _
  %v27 = vld [vmem:[%s0] sm:$0xff]
  %v28 = vld [vmem:[%s0 + $0x8] sm:$0xff]
  %v29 = vld [vmem:[%s0 + $0x10] sm:$0xff]
  %v30 = vld [vmem:[%s0 + $0x18] sm:$0xff]
  %v31 = vld [vmem:[%s0 + $0x20] sm:$0xff]
  %v32 = vld [vmem:[%s0 + $0x28] sm:$0xff]
  %v33 = vld [vmem:[%s0 + $0x30] sm:$0xff]
  %v34 = vpack.c.bf16 %v27, %v27
  %v35 = vpack.c.bf16 %v28, %v28
  %v36 = vpack.c.bf16 %v29, %v29
  %v37 = vpack.c.bf16 %v30, %v30
  %v38 = vpack.c.bf16 %v31, %v31
  %v39 = vpack.c.bf16 %v32, %v32
  %v40 = vpack.c.bf16 %v33, %v33
  %v41 = vld [vmem:[%s1] sm:$0xf]
  %v42 = vld [vmem:[%s1 + $0x4] sm:$0xf]
  %v43 = vld [vmem:[%s1 + $0x8] sm:$0xf]
  %v44 = vld [vmem:[%s1 + $0xc] sm:$0xf]
  %v45 = vld [vmem:[%s1 + $0x10] sm:$0xf]
  %v46 = vld [vmem:[%s1 + $0x14] sm:$0xf]
  %v47 = vld [vmem:[%s1 + $0x18] sm:$0xf]
  %v48 = vld [vmem:[%s1 + $0x1c] sm:$0xf]
  %v49 = vld [vmem:[%s1 + $0x20] sm:$0xf]
  %v50 = vld [vmem:[%s1 + $0x24] sm:$0xf]
  %v51 = vld [vmem:[%s1 + $0x28] sm:$0xf]
  %v52 = vld [vmem:[%s1 + $0x2c] sm:$0xf]
  %v53 = vld [vmem:[%s1 + $0x30] sm:$0xf]
  %v54 = vld [vmem:[%s1 + $0x34] sm:$0xf]
  %v55 = vld [vmem:[%s1 + $0x38] sm:$0xf]
  %v56 = vld [vmem:[%s1 + $0x3c] sm:$0xf]
  %v57 = vld [vmem:[%s1 + $0x40] sm:$0xf]
  %v58 = vld [vmem:[%s1 + $0x44] sm:$0xf]
  %v59 = vld [vmem:[%s1 + $0x48] sm:$0xf]
  %v60 = vld [vmem:[%s1 + $0x4c] sm:$0xf]
  %v61 = vld [vmem:[%s1 + $0x50] sm:$0xf]
  %v62 = vld [vmem:[%s1 + $0x54] sm:$0xf]
  %v63 = vld [vmem:[%s1 + $0x58] sm:$0xf]
  %v64 = vld [vmem:[%s1 + $0x5c] sm:$0xf]
  %v65 = vld [vmem:[%s1 + $0x60] sm:$0xf]
  %v66 = vld [vmem:[%s1 + $0x64] sm:$0xf]
  %v67 = vld [vmem:[%s1 + $0x68] sm:$0xf]
  %v68 = vld [vmem:[%s1 + $0x6c] sm:$0xf]
  %v69 = vld [vmem:[%s1 + $0x70] sm:$0xf]
  %v70 = vld [vmem:[%s1 + $0x74] sm:$0xf]
  %v71 = vld [vmem:[%s1 + $0x78] sm:$0xf]
  %v72 = vld [vmem:[%s1 + $0x7c] sm:$0xf]
  %v73 = vld [vmem:[%s1 + $0x80] sm:$0xf]
  %v74 = vld [vmem:[%s1 + $0x84] sm:$0xf]
  %v75 = vld [vmem:[%s1 + $0x88] sm:$0xf]
  %v76 = vld [vmem:[%s1 + $0x8c] sm:$0xf]
  %v77 = vld [vmem:[%s1 + $0x90] sm:$0xf]
  %v78 = vld [vmem:[%s1 + $0x94] sm:$0xf]
  %v79 = vld [vmem:[%s1 + $0x98] sm:$0xf]
  %v80 = vld [vmem:[%s1 + $0x9c] sm:$0xf]
  %v81 = vld [vmem:[%s1 + $0xa0] sm:$0xf]
  %v82 = vld [vmem:[%s1 + $0xa4] sm:$0xf]
  %v83 = vld [vmem:[%s1 + $0xa8] sm:$0xf]
  %v84 = vld [vmem:[%s1 + $0xac] sm:$0xf]
  %v85 = vld [vmem:[%s1 + $0xb0] sm:$0xf]
  %v86 = vld [vmem:[%s1 + $0xb4] sm:$0xf]
  %v87 = vld [vmem:[%s1 + $0xb8] sm:$0xf]
  %v88 = vld [vmem:[%s1 + $0xbc] sm:$0xf]
  %v89 = vld [vmem:[%s1 + $0xc0] sm:$0xf]
  %v90 = vld [vmem:[%s1 + $0xc4] sm:$0xf]
  %v91 = vld [vmem:[%s1 + $0xc8] sm:$0xf]
  %v92 = vld [vmem:[%s1 + $0xcc] sm:$0xf]
  %v93 = vld [vmem:[%s1 + $0xd0] sm:$0xf]
  %v94 = vld [vmem:[%s1 + $0xd4] sm:$0xf]
  %v95 = vld [vmem:[%s1 + $0xd8] sm:$0xf]
  %v96 = vld [vmem:[%s1 + $0xdc] sm:$0xf]
  %v97 = vld [vmem:[%s1 + $0xe0] sm:$0xf]
  %v98 = vld [vmem:[%s1 + $0xe4] sm:$0xf]
  %v99 = vld [vmem:[%s1 + $0xe8] sm:$0xf]
  %v100 = vld [vmem:[%s1 + $0xec] sm:$0xf]
  %v101 = vld [vmem:[%s1 + $0xf0] sm:$0xf]
  %v102 = vld [vmem:[%s1 + $0xf4] sm:$0xf]
  %v103 = vld [vmem:[%s1 + $0xf8] sm:$0xf]
  %v104 = vld [vmem:[%s1 + $0xfc] sm:$0xf]
  %v105 = vld [vmem:[%s1 + $0x100] sm:$0xf]
  %v106 = vld [vmem:[%s1 + $0x104] sm:$0xf]
  %v107 = vld [vmem:[%s1 + $0x108] sm:$0xf]
  %v108 = vld [vmem:[%s1 + $0x10c] sm:$0xf]
  %v109 = vld [vmem:[%s1 + $0x110] sm:$0xf]
  %v110 = vld [vmem:[%s1 + $0x114] sm:$0xf]
  %v111 = vld [vmem:[%s1 + $0x118] sm:$0xf]
  %v112 = vld [vmem:[%s1 + $0x11c] sm:$0xf]
  %v113 = vld [vmem:[%s1 + $0x120] sm:$0xf]
  %v114 = vld [vmem:[%s1 + $0x124] sm:$0xf]
  %v115 = vld [vmem:[%s1 + $0x128] sm:$0xf]
  %v116 = vld [vmem:[%s1 + $0x12c] sm:$0xf]
  %v117 = vld [vmem:[%s1 + $0x130] sm:$0xf]
  %v118 = vld [vmem:[%s1 + $0x134] sm:$0xf]
  %v119 = vld [vmem:[%s1 + $0x138] sm:$0xf]
  %v120 = vld [vmem:[%s1 + $0x13c] sm:$0xf]
  %v121 = vld [vmem:[%s1 + $0x140] sm:$0xf]
  %v122 = vld [vmem:[%s1 + $0x144] sm:$0xf]
  %v123 = vld [vmem:[%s1 + $0x148] sm:$0xf]
  %v124 = vld [vmem:[%s1 + $0x14c] sm:$0xf]
  %v125 = vld [vmem:[%s1 + $0x150] sm:$0xf]
  %v126 = vld [vmem:[%s1 + $0x154] sm:$0xf]
  %v127 = vld [vmem:[%s1 + $0x158] sm:$0xf]
  %v128 = vld [vmem:[%s1 + $0x15c] sm:$0xf]
  %v129 = vld [vmem:[%s1 + $0x160] sm:$0xf]
  %v130 = vld [vmem:[%s1 + $0x164] sm:$0xf]
  %v131 = vld [vmem:[%s1 + $0x168] sm:$0xf]
  %v132 = vld [vmem:[%s1 + $0x16c] sm:$0xf]
  %v133 = vld [vmem:[%s1 + $0x170] sm:$0xf]
  %v134 = vld [vmem:[%s1 + $0x174] sm:$0xf]
  %v135 = vld [vmem:[%s1 + $0x178] sm:$0xf]
  %v136 = vld [vmem:[%s1 + $0x17c] sm:$0xf]
  %v137 = vld [vmem:[%s1 + $0x180] sm:$0xf]
  %v138 = vld [vmem:[%s1 + $0x184] sm:$0xf]
  %v139 = vld [vmem:[%s2] sm:$0x1]
  %v141 = vlaneseq
  %v142 = vshrl.u32 %v141, 7
  %v143 = vsub.s32 0, %v142
  %v144 = vrot.slane %v139, %v143
  %v244 = vunpack.c.l.b16 %v41
  %v245 = vunpack.c.l.b16 %v42
  %v246 = vunpack.c.l.b16 %v43
  %v247 = vunpack.c.l.b16 %v44
  %v248 = vunpack.c.l.b16 %v45
  %v249 = vunpack.c.l.b16 %v46
  %v250 = vunpack.c.l.b16 %v47
  %v251 = vunpack.c.l.b16 %v48
  %v252 = vunpack.c.l.b16 %v49
  %v253 = vunpack.c.l.b16 %v50
  %v254 = vunpack.c.l.b16 %v51
  %v255 = vunpack.c.l.b16 %v52
  %v256 = vunpack.c.l.b16 %v53
  %v257 = vunpack.c.l.b16 %v54
  %v258 = vunpack.c.l.b16 %v55
  %v259 = vunpack.c.l.b16 %v56
  %v260 = vunpack.c.l.b16 %v57
  %v261 = vunpack.c.l.b16 %v58
  %v262 = vunpack.c.l.b16 %v59
  %v263 = vunpack.c.l.b16 %v60
  %v264 = vunpack.c.l.b16 %v61
  %v265 = vunpack.c.l.b16 %v62
  %v266 = vunpack.c.l.b16 %v63
  %v267 = vunpack.c.l.b16 %v64
  %v268 = vunpack.c.l.b16 %v65
  %v269 = vunpack.c.l.b16 %v66
  %v270 = vunpack.c.l.b16 %v67
  %v271 = vunpack.c.l.b16 %v68
  %v272 = vunpack.c.l.b16 %v69
  %v273 = vunpack.c.l.b16 %v70
  %v274 = vunpack.c.l.b16 %v71
  %v275 = vunpack.c.l.b16 %v72
  %v276 = vunpack.c.l.b16 %v73
  %v277 = vunpack.c.l.b16 %v74
  %v278 = vunpack.c.l.b16 %v75
  %v279 = vunpack.c.l.b16 %v76
  %v280 = vunpack.c.l.b16 %v77
  %v281 = vunpack.c.l.b16 %v78
  %v282 = vunpack.c.l.b16 %v79
  %v283 = vunpack.c.l.b16 %v80
  %v284 = vunpack.c.l.b16 %v81
  %v285 = vunpack.c.l.b16 %v82
  %v286 = vunpack.c.l.b16 %v83
  %v287 = vunpack.c.l.b16 %v84
  %v288 = vunpack.c.l.b16 %v85
  %v289 = vunpack.c.l.b16 %v86
  %v290 = vunpack.c.l.b16 %v87
  %v291 = vunpack.c.l.b16 %v88
  %v292 = vunpack.c.l.b16 %v89
  %v293 = vunpack.c.l.b16 %v90
  %v294 = vunpack.c.l.b16 %v91
  %v295 = vunpack.c.l.b16 %v92
  %v296 = vunpack.c.l.b16 %v93
  %v297 = vunpack.c.l.b16 %v94
  %v298 = vunpack.c.l.b16 %v95
  %v299 = vunpack.c.l.b16 %v96
  %v300 = vunpack.c.l.b16 %v97
  %v301 = vunpack.c.l.b16 %v98
  %v302 = vunpack.c.l.b16 %v99
  %v303 = vunpack.c.l.b16 %v100
  %v304 = vunpack.c.l.b16 %v101
  %v305 = vunpack.c.l.b16 %v102
  %v306 = vunpack.c.l.b16 %v103
  %v307 = vunpack.c.l.b16 %v104
  %v308 = vunpack.c.l.b16 %v105
  %v309 = vunpack.c.l.b16 %v106
  %v310 = vunpack.c.l.b16 %v107
  %v311 = vunpack.c.l.b16 %v108
  %v312 = vunpack.c.l.b16 %v109
  %v313 = vunpack.c.l.b16 %v110
  %v314 = vunpack.c.l.b16 %v111
  %v315 = vunpack.c.l.b16 %v112
  %v316 = vunpack.c.l.b16 %v113
  %v317 = vunpack.c.l.b16 %v114
  %v318 = vunpack.c.l.b16 %v115
  %v319 = vunpack.c.l.b16 %v116
  %v320 = vunpack.c.l.b16 %v117
  %v321 = vunpack.c.l.b16 %v118
  %v322 = vunpack.c.l.b16 %v119
  %v323 = vunpack.c.l.b16 %v120
  %v324 = vunpack.c.l.b16 %v121
  %v325 = vunpack.c.l.b16 %v122
  %v326 = vunpack.c.l.b16 %v123
  %v327 = vunpack.c.l.b16 %v124
  %v328 = vunpack.c.l.b16 %v125
  %v329 = vunpack.c.l.b16 %v126
  %v330 = vunpack.c.l.b16 %v127
  %v331 = vunpack.c.l.b16 %v128
  %v332 = vunpack.c.l.b16 %v129
  %v333 = vunpack.c.l.b16 %v130
  %v334 = vunpack.c.l.b16 %v131
  %v335 = vunpack.c.l.b16 %v132
  %v336 = vunpack.c.l.b16 %v133
  %v337 = vunpack.c.l.b16 %v134
  %v338 = vunpack.c.l.b16 %v135
  %v339 = vunpack.c.l.b16 %v136
  %v340 = vunpack.c.l.b16 %v137
  %v341 = vunpack.c.l.b16 %v138
  %v342 = vpack.c.b16 %v245, %v244
  %v343 = vpack.c.b16 %v247, %v246
  %v344 = vpack.c.b16 %v249, %v248
  %v345 = vpack.c.b16 %v251, %v250
  %v346 = vpack.c.b16 %v253, %v252
  %v347 = vpack.c.b16 %v255, %v254
  %v348 = vpack.c.b16 %v257, %v256
  %v349 = vpack.c.b16 %v259, %v258
  %v350 = vpack.c.b16 %v261, %v260
  %v351 = vpack.c.b16 %v263, %v262
  %v352 = vpack.c.b16 %v265, %v264
  %v353 = vpack.c.b16 %v267, %v266
  %v354 = vpack.c.b16 %v269, %v268
  %v355 = vpack.c.b16 %v271, %v270
  %v356 = vpack.c.b16 %v273, %v272
  %v357 = vpack.c.b16 %v275, %v274
  %v358 = vpack.c.b16 %v277, %v276
  %v359 = vpack.c.b16 %v279, %v278
  %v360 = vpack.c.b16 %v281, %v280
  %v361 = vpack.c.b16 %v283, %v282
  %v362 = vpack.c.b16 %v285, %v284
  %v363 = vpack.c.b16 %v287, %v286
  %v364 = vpack.c.b16 %v289, %v288
  %v365 = vpack.c.b16 %v291, %v290
  %v366 = vpack.c.b16 %v293, %v292
  %v367 = vpack.c.b16 %v295, %v294
  %v368 = vpack.c.b16 %v297, %v296
  %v369 = vpack.c.b16 %v299, %v298
  %v370 = vpack.c.b16 %v301, %v300
  %v371 = vpack.c.b16 %v303, %v302
  %v372 = vpack.c.b16 %v305, %v304
  %v373 = vpack.c.b16 %v307, %v306
  %v374 = vpack.c.b16 %v309, %v308
  %v375 = vpack.c.b16 %v311, %v310
  %v376 = vpack.c.b16 %v313, %v312
  %v377 = vpack.c.b16 %v315, %v314
  %v378 = vpack.c.b16 %v317, %v316
  %v379 = vpack.c.b16 %v319, %v318
  %v380 = vpack.c.b16 %v321, %v320
  %v381 = vpack.c.b16 %v323, %v322
  %v382 = vpack.c.b16 %v325, %v324
  %v383 = vpack.c.b16 %v327, %v326
  %v384 = vpack.c.b16 %v329, %v328
  %v385 = vpack.c.b16 %v331, %v330
  %v386 = vpack.c.b16 %v333, %v332
  %v387 = vpack.c.b16 %v335, %v334
  %v388 = vpack.c.b16 %v337, %v336
  %v389 = vpack.c.b16 %v339, %v338
  %v390 = vpack.c.b16 %v341, %v340
  %vm440 = vcmask 130048
  %v442 = vsel %vm440, %v40, 0
  %444 = vmatprep.subr.bf16.mxu0 0
  %445 = vmatpush1.bf16.msra.mxu0 %v342
  %446 = vmatprep.subr.bf16.mxu0 0
  %447 = vmatpush1.bf16.msra.mxu0 %v343
  %448 = vmatprep.subr.bf16.mxu0 0
  %449 = vmatpush1.bf16.msra.mxu0 %v344
  %450 = vmatprep.subr.bf16.mxu0 0
  %451 = vmatpush1.bf16.msra.mxu0 %v345
  %452 = vmatprep.subr.bf16.mxu0 0
  %453 = vmatpush1.bf16.msra.mxu0 %v346
  %454 = vmatprep.subr.bf16.mxu0 0
  %455 = vmatpush1.bf16.msra.mxu0 %v347
  %456 = vmatprep.subr.bf16.mxu0 0
  %457 = vmatpush1.bf16.msra.mxu0 %v348
  %458 = vmatprep.subr.bf16.mxu0 0
  %459 = vmatpush1.bf16.msra.mxu0 %v349
  %460 = vmatprep.subr.bf16.mxu0 0
  %461 = vmatpush1.bf16.msra.mxu0 %v350
  %462 = vmatprep.subr.bf16.mxu0 0
  %463 = vmatpush1.bf16.msra.mxu0 %v351
  %464 = vmatprep.subr.bf16.mxu0 0
  %465 = vmatpush1.bf16.msra.mxu0 %v352
  %466 = vmatprep.subr.bf16.mxu0 0
  %467 = vmatpush1.bf16.msra.mxu0 %v353
  %468 = vmatprep.subr.bf16.mxu0 0
  %469 = vmatpush1.bf16.msra.mxu0 %v354
  %470 = vmatprep.subr.bf16.mxu0 0
  %471 = vmatpush1.bf16.msra.mxu0 %v355
  %472 = vmatprep.subr.bf16.mxu0 0
  %473 = vmatpush1.bf16.msra.mxu0 %v356
  %474 = vmatprep.subr.bf16.mxu0 0
  %475 = vmatpush1.bf16.msra.mxu0 %v357
  %476 = vmatprep.mubr.bf16.mxu0 %v35
  %477 = vmatmul.mubr.bf16.gmra.mrb[0].mxu0 %v34
  %v478 = vpop.f32.mrb[0].mxu0
  %v479 = vadd.f32 %v144, %v478
  %v480 = vpop.f32.mrb[0].mxu0
  %v481 = vpop.f32.mrb[0].mxu0
  %v482 = vpop.f32.mrb[0].mxu0
  %483 = vdwg.mxu0
  %484 = vmatprep.subr.bf16.mxu0 0
  %485 = vmatpush1.bf16.msra.mxu0 %v358
  %486 = vmatprep.subr.bf16.mxu0 0
  %487 = vmatpush1.bf16.msra.mxu0 %v359
  %488 = vmatprep.subr.bf16.mxu0 0
  %489 = vmatpush1.bf16.msra.mxu0 %v360
  %490 = vmatprep.subr.bf16.mxu0 0
  %491 = vmatpush1.bf16.msra.mxu0 %v361
  %492 = vmatprep.subr.bf16.mxu0 0
  %493 = vmatpush1.bf16.msra.mxu0 %v362
  %494 = vmatprep.subr.bf16.mxu0 0
  %495 = vmatpush1.bf16.msra.mxu0 %v363
  %496 = vmatprep.subr.bf16.mxu0 0
  %497 = vmatpush1.bf16.msra.mxu0 %v364
  %498 = vmatprep.subr.bf16.mxu0 0
  %499 = vmatpush1.bf16.msra.mxu0 %v365
  %500 = vmatprep.subr.bf16.mxu0 0
  %501 = vmatpush1.bf16.msra.mxu0 %v366
  %502 = vmatprep.subr.bf16.mxu0 0
  %503 = vmatpush1.bf16.msra.mxu0 %v367
  %504 = vmatprep.subr.bf16.mxu0 0
  %505 = vmatpush1.bf16.msra.mxu0 %v368
  %506 = vmatprep.subr.bf16.mxu0 0
  %507 = vmatpush1.bf16.msra.mxu0 %v369
  %508 = vmatprep.subr.bf16.mxu0 0
  %509 = vmatpush1.bf16.msra.mxu0 %v370
  %510 = vmatprep.subr.bf16.mxu0 0
  %511 = vmatpush1.bf16.msra.mxu0 %v371
  %512 = vmatprep.subr.bf16.mxu0 0
  %513 = vmatpush1.bf16.msra.mxu0 %v372
  %514 = vmatprep.subr.bf16.mxu0 0
  %515 = vmatpush1.bf16.msra.mxu0 %v373
  %516 = vmatprep.mubr.bf16.mxu0 %v37
  %517 = vmatmul.mubr.bf16.gmra.mrb[0].mxu0 %v36
  %v518 = vpop.f32.mrb[0].mxu0
  %v519 = vadd.f32 %v479, %v518
  %v520 = vpop.f32.mrb[0].mxu0
  %v521 = vpop.f32.mrb[0].mxu0
  %v522 = vpop.f32.mrb[0].mxu0
  %523 = vdwg.mxu0
  %524 = vmatprep.subr.bf16.mxu0 0
  %525 = vmatpush1.bf16.msra.mxu0 %v374
  %526 = vmatprep.subr.bf16.mxu0 0
  %527 = vmatpush1.bf16.msra.mxu0 %v375
  %528 = vmatprep.subr.bf16.mxu0 0
  %529 = vmatpush1.bf16.msra.mxu0 %v376
  %530 = vmatprep.subr.bf16.mxu0 0
  %531 = vmatpush1.bf16.msra.mxu0 %v377
  %532 = vmatprep.subr.bf16.mxu0 0
  %533 = vmatpush1.bf16.msra.mxu0 %v378
  %534 = vmatprep.subr.bf16.mxu0 0
  %535 = vmatpush1.bf16.msra.mxu0 %v379
  %536 = vmatprep.subr.bf16.mxu0 0
  %537 = vmatpush1.bf16.msra.mxu0 %v380
  %538 = vmatprep.subr.bf16.mxu0 0
  %539 = vmatpush1.bf16.msra.mxu0 %v381
  %540 = vmatprep.subr.bf16.mxu0 0
  %541 = vmatpush1.bf16.msra.mxu0 %v382
  %542 = vmatprep.subr.bf16.mxu0 0
  %543 = vmatpush1.bf16.msra.mxu0 %v383
  %544 = vmatprep.subr.bf16.mxu0 0
  %545 = vmatpush1.bf16.msra.mxu0 %v384
  %546 = vmatprep.subr.bf16.mxu0 0
  %547 = vmatpush1.bf16.msra.mxu0 %v385
  %548 = vmatprep.subr.bf16.mxu0 0
  %549 = vmatpush1.bf16.msra.mxu0 %v386
  %550 = vmatprep.subr.bf16.mxu0 0
  %551 = vmatpush1.bf16.msra.mxu0 %v387
  %552 = vmatprep.subr.bf16.mxu0 0
  %553 = vmatpush1.bf16.msra.mxu0 %v388
  %554 = vmatprep.subr.bf16.mxu0 0
  %555 = vmatpush1.bf16.msra.mxu0 %v389
  %556 = vmatprep.mubr.bf16.mxu0 %v39
  %557 = vmatmul.mubr.bf16.gmra.mrb[0].mxu0 %v38
  %v558 = vpop.f32.mrb[0].mxu0
  %v559 = vadd.f32 %v519, %v558
  %v560 = vpop.f32.mrb[0].mxu0
  %v561 = vpop.f32.mrb[0].mxu0
  %v562 = vpop.f32.mrb[0].mxu0
  %563 = vdwg.mxu0
  %564 = vmatprep.subr.bf16.mxu0 0
  %565 = vmatpush1.bf16.msra.mxu0 %v390
  %566 = vmatprep.subr.bf16.mxu0 0
  %567 = vmatpush1.bf16.msra.mxu0 0
  %568 = vmatprep.subr.bf16.mxu0 0
  %569 = vmatpush1.bf16.msra.mxu0 0
  %570 = vmatprep.subr.bf16.mxu0 0
  %571 = vmatpush1.bf16.msra.mxu0 0
  %572 = vmatprep.subr.bf16.mxu0 0
  %573 = vmatpush1.bf16.msra.mxu0 0
  %574 = vmatprep.subr.bf16.mxu0 0
  %575 = vmatpush1.bf16.msra.mxu0 0
  %576 = vmatprep.subr.bf16.mxu0 0
  %577 = vmatpush1.bf16.msra.mxu0 0
  %578 = vmatprep.subr.bf16.mxu0 0
  %579 = vmatpush1.bf16.msra.mxu0 0
  %580 = vmatprep.subr.bf16.mxu0 0
  %581 = vmatpush1.bf16.msra.mxu0 0
  %582 = vmatprep.subr.bf16.mxu0 0
  %583 = vmatpush1.bf16.msra.mxu0 0
  %584 = vmatprep.subr.bf16.mxu0 0
  %585 = vmatpush1.bf16.msra.mxu0 0
  %586 = vmatprep.subr.bf16.mxu0 0
  %587 = vmatpush1.bf16.msra.mxu0 0
  %588 = vmatprep.subr.bf16.mxu0 0
  %589 = vmatpush1.bf16.msra.mxu0 0
  %590 = vmatprep.subr.bf16.mxu0 0
  %591 = vmatpush1.bf16.msra.mxu0 0
  %592 = vmatprep.subr.bf16.mxu0 0
  %593 = vmatpush1.bf16.msra.mxu0 0
  %594 = vmatprep.subr.bf16.mxu0 0
  %595 = vmatpush1.bf16.msra.mxu0 0
  %596 = vmatprep.mubr.bf16.mxu0 0
  %597 = vmatmul.mubr.bf16.gmra.mrb[0].mxu0 %v442
  %v598 = vpop.f32.mrb[0].mxu0
  %v599 = vadd.f32 %v559, %v598
  %v600 = vpop.f32.mrb[0].mxu0
  %v601 = vpop.f32.mrb[0].mxu0
  %v602 = vpop.f32.mrb[0].mxu0
  %603 = vdwg.mxu0
  %v604 = vmax.f32 %v599, 0.0
  %v605 = vpack.c.bf16 %v604, %v604
  %v606 = vld [vmem:[%s3] sm:$0xf]
  %v607 = vld [vmem:[%s3 + $0x4] sm:$0xf]
  %v608 = vld [vmem:[%s3 + $0x8] sm:$0xf]
  %v609 = vld [vmem:[%s3 + $0xc] sm:$0xf]
  %v610 = vld [vmem:[%s3 + $0x10] sm:$0xf]
  %v611 = vld [vmem:[%s3 + $0x14] sm:$0xf]
  %v612 = vld [vmem:[%s3 + $0x18] sm:$0xf]
  %v613 = vld [vmem:[%s3 + $0x1c] sm:$0xf]
  %v614 = vld [vmem:[%s3 + $0x20] sm:$0xf]
  %v615 = vld [vmem:[%s3 + $0x24] sm:$0xf]
  %v616 = vld [vmem:[%s3 + $0x28] sm:$0xf]
  %v617 = vld [vmem:[%s3 + $0x2c] sm:$0xf]
  %v618 = vld [vmem:[%s3 + $0x30] sm:$0xf]
  %v619 = vld [vmem:[%s3 + $0x34] sm:$0xf]
  %v620 = vld [vmem:[%s3 + $0x38] sm:$0xf]
  %v621 = vld [vmem:[%s3 + $0x3c] sm:$0xf]
  %v622 = vld [vmem:[%s4] sm:$0x1]
  %v624 = vlaneseq
  %v625 = vshrl.u32 %v624, 7
  %v626 = vsub.s32 0, %v625
  %v627 = vrot.slane %v622, %v626
  %v645 = vunpack.c.l.b16 %v606
  %v646 = vunpack.c.l.b16 %v607
  %v647 = vunpack.c.l.b16 %v608
  %v648 = vunpack.c.l.b16 %v609
  %v649 = vunpack.c.l.b16 %v610
  %v650 = vunpack.c.l.b16 %v611
  %v651 = vunpack.c.l.b16 %v612
  %v652 = vunpack.c.l.b16 %v613
  %v653 = vunpack.c.l.b16 %v614
  %v654 = vunpack.c.l.b16 %v615
  %v655 = vunpack.c.l.b16 %v616
  %v656 = vunpack.c.l.b16 %v617
  %v657 = vunpack.c.l.b16 %v618
  %v658 = vunpack.c.l.b16 %v619
  %v659 = vunpack.c.l.b16 %v620
  %v660 = vunpack.c.l.b16 %v621
  %v661 = vpack.c.b16 %v646, %v645
  %v662 = vpack.c.b16 %v648, %v647
  %v663 = vpack.c.b16 %v650, %v649
  %v664 = vpack.c.b16 %v652, %v651
  %v665 = vpack.c.b16 %v654, %v653
  %v666 = vpack.c.b16 %v656, %v655
  %v667 = vpack.c.b16 %v658, %v657
  %v668 = vpack.c.b16 %v660, %v659
  %677 = vmatprep.subr.bf16.mxu0 0
  %678 = vmatpush1.bf16.msra.mxu0 %v661
  %679 = vmatprep.subr.bf16.mxu0 0
  %680 = vmatpush1.bf16.msra.mxu0 %v662
  %681 = vmatprep.subr.bf16.mxu0 0
  %682 = vmatpush1.bf16.msra.mxu0 %v663
  %683 = vmatprep.subr.bf16.mxu0 0
  %684 = vmatpush1.bf16.msra.mxu0 %v664
  %685 = vmatprep.subr.bf16.mxu0 0
  %686 = vmatpush1.bf16.msra.mxu0 %v665
  %687 = vmatprep.subr.bf16.mxu0 0
  %688 = vmatpush1.bf16.msra.mxu0 %v666
  %689 = vmatprep.subr.bf16.mxu0 0
  %690 = vmatpush1.bf16.msra.mxu0 %v667
  %691 = vmatprep.subr.bf16.mxu0 0
  %692 = vmatpush1.bf16.msra.mxu0 %v668
  %693 = vmatprep.subr.bf16.mxu0 0
  %694 = vmatpush1.bf16.msra.mxu0 0
  %695 = vmatprep.subr.bf16.mxu0 0
  %696 = vmatpush1.bf16.msra.mxu0 0
  %697 = vmatprep.subr.bf16.mxu0 0
  %698 = vmatpush1.bf16.msra.mxu0 0
  %699 = vmatprep.subr.bf16.mxu0 0
  %700 = vmatpush1.bf16.msra.mxu0 0
  %701 = vmatprep.subr.bf16.mxu0 0
  %702 = vmatpush1.bf16.msra.mxu0 0
  %703 = vmatprep.subr.bf16.mxu0 0
  %704 = vmatpush1.bf16.msra.mxu0 0
  %705 = vmatprep.subr.bf16.mxu0 0
  %706 = vmatpush1.bf16.msra.mxu0 0
  %707 = vmatprep.subr.bf16.mxu0 0
  %708 = vmatpush1.bf16.msra.mxu0 0
  %709 = vmatprep.mubr.bf16.mxu0 0
  %710 = vmatmul.mubr.bf16.gmra.mrb[0].mxu0 %v605
  %v711 = vpop.f32.mrb[0].mxu0
  %v712 = vadd.f32 %v627, %v711
  %v713 = vpop.f32.mrb[0].mxu0
  %v714 = vpop.f32.mrb[0].mxu0
  %v715 = vpop.f32.mrb[0].mxu0
  %716 = vdwg.mxu0
  %v717 = vmax.f32 %v712, 0.0
  %v718 = vpack.c.bf16 %v717, %v717
  %v719 = vld [vmem:[%s5] sm:$0xf]
  %v720 = vld [vmem:[%s5 + $0x4] sm:$0xf]
  %v721 = vld [vmem:[%s5 + $0x8] sm:$0xf]
  %v722 = vld [vmem:[%s5 + $0xc] sm:$0xf]
  %v723 = vld [vmem:[%s5 + $0x10] sm:$0xf]
  %v724 = vld [vmem:[%s5 + $0x14] sm:$0xf]
  %v725 = vld [vmem:[%s5 + $0x18] sm:$0xf]
  %v726 = vld [vmem:[%s5 + $0x1c] sm:$0xf]
  %v727 = vld [vmem:[%s5 + $0x20] sm:$0xf]
  %v728 = vld [vmem:[%s5 + $0x24] sm:$0xf]
  %v729 = vld [vmem:[%s5 + $0x28] sm:$0xf]
  %v730 = vld [vmem:[%s5 + $0x2c] sm:$0xf]
  %v731 = vld [vmem:[%s5 + $0x30] sm:$0xf]
  %v732 = vld [vmem:[%s5 + $0x34] sm:$0xf]
  %v733 = vld [vmem:[%s5 + $0x38] sm:$0xf]
  %v734 = vld [vmem:[%s5 + $0x3c] sm:$0xf]
  %v735 = vld [vmem:[%s6] sm:$0x1]
  %v737 = vlaneseq
  %v738 = vshrl.u32 %v737, 7
  %v739 = vsub.s32 0, %v738
  %v740 = vrot.slane %v735, %v739
  %v758 = vunpack.c.l.b16 %v719
  %v759 = vunpack.c.l.b16 %v720
  %v760 = vunpack.c.l.b16 %v721
  %v761 = vunpack.c.l.b16 %v722
  %v762 = vunpack.c.l.b16 %v723
  %v763 = vunpack.c.l.b16 %v724
  %v764 = vunpack.c.l.b16 %v725
  %v765 = vunpack.c.l.b16 %v726
  %v766 = vunpack.c.l.b16 %v727
  %v767 = vunpack.c.l.b16 %v728
  %v768 = vunpack.c.l.b16 %v729
  %v769 = vunpack.c.l.b16 %v730
  %v770 = vunpack.c.l.b16 %v731
  %v771 = vunpack.c.l.b16 %v732
  %v772 = vunpack.c.l.b16 %v733
  %v773 = vunpack.c.l.b16 %v734
  %v774 = vpack.c.b16 %v759, %v758
  %v775 = vpack.c.b16 %v761, %v760
  %v776 = vpack.c.b16 %v763, %v762
  %v777 = vpack.c.b16 %v765, %v764
  %v778 = vpack.c.b16 %v767, %v766
  %v779 = vpack.c.b16 %v769, %v768
  %v780 = vpack.c.b16 %v771, %v770
  %v781 = vpack.c.b16 %v773, %v772
  %790 = vmatprep.subr.bf16.mxu0 0
  %791 = vmatpush1.bf16.msra.mxu0 %v774
  %792 = vmatprep.subr.bf16.mxu0 0
  %793 = vmatpush1.bf16.msra.mxu0 %v775
  %794 = vmatprep.subr.bf16.mxu0 0
  %795 = vmatpush1.bf16.msra.mxu0 %v776
  %796 = vmatprep.subr.bf16.mxu0 0
  %797 = vmatpush1.bf16.msra.mxu0 %v777
  %798 = vmatprep.subr.bf16.mxu0 0
  %799 = vmatpush1.bf16.msra.mxu0 %v778
  %800 = vmatprep.subr.bf16.mxu0 0
  %801 = vmatpush1.bf16.msra.mxu0 %v779
  %802 = vmatprep.subr.bf16.mxu0 0
  %803 = vmatpush1.bf16.msra.mxu0 %v780
  %804 = vmatprep.subr.bf16.mxu0 0
  %805 = vmatpush1.bf16.msra.mxu0 %v781
  %806 = vmatprep.subr.bf16.mxu0 0
  %807 = vmatpush1.bf16.msra.mxu0 0
  %808 = vmatprep.subr.bf16.mxu0 0
  %809 = vmatpush1.bf16.msra.mxu0 0
  %810 = vmatprep.subr.bf16.mxu0 0
  %811 = vmatpush1.bf16.msra.mxu0 0
  %812 = vmatprep.subr.bf16.mxu0 0
  %813 = vmatpush1.bf16.msra.mxu0 0
  %814 = vmatprep.subr.bf16.mxu0 0
  %815 = vmatpush1.bf16.msra.mxu0 0
  %816 = vmatprep.subr.bf16.mxu0 0
  %817 = vmatpush1.bf16.msra.mxu0 0
  %818 = vmatprep.subr.bf16.mxu0 0
  %819 = vmatpush1.bf16.msra.mxu0 0
  %820 = vmatprep.subr.bf16.mxu0 0
  %821 = vmatpush1.bf16.msra.mxu0 0
  %822 = vmatprep.mubr.bf16.mxu0 0
  %823 = vmatmul.mubr.bf16.gmra.mrb[0].mxu0 %v718
  %v824 = vpop.f32.mrb[0].mxu0
  %v825 = vadd.f32 %v740, %v824
  %v826 = vpop.f32.mrb[0].mxu0
  %v827 = vpop.f32.mrb[0].mxu0
  %v828 = vpop.f32.mrb[0].mxu0
  %829 = vdwg.mxu0
  %v830 = vpack.c.bf16 %v825, %v825
  %831 = vst [vmem:[%s7] sm:$0xf] %v830
  // Predicated region
  $region30: #{mlp_forward.1} parent=0 // pred_check
    _
  $region31: #{mlp_forward.1} parent=0 // pred_check_branch
    %833 = sbr.rel (0) target = $region33
  $region32: #{mlp_forward.1} parent=0 // pred_region
    _
  $region33: #{mlp_forward.1} parent=0 // pred_fallthru
    _
  // Predicated region
  $region34: #{mlp_forward.1} parent=0 // pred_check
    _
  $region35: #{mlp_forward.1} parent=0 // pred_check_branch
    %835 = sbr.rel (0) target = $region37
  $region36: #{mlp_forward.1} parent=0 // pred_region
    _
  $region37: #{mlp_forward.1} parent=0 // pred_fallthru
    _

</llo_original>
